<compile_context>
chip_gen: v7x
topology: tpu7x:2x2x1
jax: 0.10.0
libtpu: 0.0.40
codegen_flags: <defaults>
</compile_context>

<pallas_src>
import functools
import random

import jax
import jax.numpy as jnp
from jax.experimental import pallas as pl
from jax.experimental.pallas import tpu as pltpu


# --------------------------------------------------------------------- hardware query
def _vmem_capacity_bytes():
    try:
        return int(pltpu.get_tpu_info().vmem_capacity_bytes)
    except Exception:
        return 64 * 1024 * 1024          # conservative fallback (v7x per-TC VMEM)


def _round_up(x, m):
    return ((x + m - 1) // m) * m


# ----------------------------------------------------------------------------- weights
def _padded_bilinear_matrix(size, pad, *, out_size, in_size):
    """(out_size, in_size) interpolation matrix.

    Rows [pad, pad + size) hold the torchvision BILINEAR (antialias=False, half-pixel
    centers) weights for a `size`-long resize of an `in_size`-long axis; all other rows
    are zero (they become the zero padding).  `size` / `pad` may be traced values, so
    the shape never changes with the random draw.
    """
    rows = jnp.arange(out_size, dtype=jnp.float32)
    dst = rows - pad                               # coordinate inside the resized image
    valid = (dst >= 0) & (dst < size)
    scale = in_size / size                         # in/out scale (float)
    src = jnp.clip((dst + 0.5) * scale - 0.5, 0.0, float(in_size - 1))
    lo = jnp.floor(src)
    frac = src - lo
    lo_i = lo.astype(jnp.int32)
    hi_i = jnp.minimum(lo_i + 1, in_size - 1)
    r = jnp.arange(out_size)
    w = jnp.zeros((out_size, in_size), jnp.float32)
    w = w.at[r, lo_i].add(jnp.where(valid, 1.0 - frac, 0.0))
    w = w.at[r, hi_i].add(jnp.where(valid, frac, 0.0))
    return w


def _fused_resize_pad_weight(size, pad_y, pad_x, *, end_size, in_h, in_w):
    """Fused resize+pad weight, pre-transposed to (H*W, E*E) for a plain matmul."""
    wy = _padded_bilinear_matrix(size, pad_y, out_size=end_size, in_size=in_h)   # (E, H)
    wx = _padded_bilinear_matrix(size, pad_x, out_size=end_size, in_size=in_w)   # (E, W)
    wk = jnp.einsum('yh,xw->hwyx', wy, wx)                                       # (H,W,E,E)
    return wk.reshape(in_h * in_w, end_size * end_size)


# ------------------------------------------------------------------------------ specs
def _weight_spec(block_shape, single_buffer):
    """Constant-index weight BlockSpec; single-buffered when the runtime supports it
    (halves the resident-weight VMEM footprint — matters for the fused path)."""
    index_map = lambda i: tuple(0 for _ in block_shape)
    if single_buffer and hasattr(pl, "Buffered"):
        return pl.BlockSpec(block_shape, index_map, pipeline_mode=pl.Buffered(1))
    return pl.BlockSpec(block_shape, index_map)


# ----------------------------------------------------------------------------- kernels
def _fused_kernel(x_ref, w_ref, o_ref, *, compute_dtype):
    """(b_tile, H*W) @ (H*W, E*E) on the MXU, f32 accumulation, one lane-dense store
    of the already-padded output tile."""
    x = x_ref[...].astype(compute_dtype)
    acc = jnp.dot(x, w_ref[...], preferred_element_type=jnp.float32)
    o_ref[...] = acc.astype(o_ref.dtype)


def _separable_kernel(x_ref, wxt_ref, wyt_ref, o_ref, *, compute_dtype):
    """Separable resize+pad: width resize with (b_tile*H) as M, minor-dim transpose,
    height resize with (b_tile*E) as M, final minor-dim transpose."""
    bt, h, w = x_ref.shape
    e = wxt_ref.shape[1]
    x = x_ref[...].reshape(bt * h, w).astype(compute_dtype)
    a = jnp.dot(x, wxt_ref[...], preferred_element_type=jnp.float32)        # (bt*H, Ex)
    a = jnp.swapaxes(a.reshape(bt, h, e), 1, 2).astype(compute_dtype)       # (bt, Ex, H)
    o = jnp.dot(a.reshape(bt * e, h), wyt_ref[...],
                preferred_element_type=jnp.float32)                         # (bt*Ex, Ey)
    o_ref[...] = jnp.swapaxes(o.reshape(bt, e, e), 1, 2).astype(o_ref.dtype)  # (bt, Ey, Ex)


# -------------------------------------------------------------------------------- impl
def _resize_pad_impl(img_nchw, size, pad_y, pad_x, *, end_size, b_tile, mode,
                     single_buffer_weight, compute_dtype_name, vmem_limit_bytes):
    N, C, H, W = img_nchw.shape
    E = end_size
    B, HW, EE = N * C, H * W, E * E
    compute_dtype = jnp.dtype(compute_dtype_name)
    out_dtype = img_nchw.dtype
    in_b = jnp.dtype(out_dtype).itemsize
    w_b = jnp.dtype(compute_dtype).itemsize

    grid_b = pl.cdiv(B, b_tile)      # no input padding / output slicing: ragged last
    cparams = pltpu.CompilerParams(  # block handled by Pallas (masked writeback).
        dimension_semantics=("parallel",),
        vmem_limit_bytes=vmem_limit_bytes,
    )

    if mode == "fused":
        wk = _fused_resize_pad_weight(
            size, pad_y, pad_x, end_size=E, in_h=H, in_w=W).astype(compute_dtype)
        x2 = img_nchw.reshape(B, HW)                     # lane-dense rows, B -> MXU M
        cost = pl.CostEstimate(
            flops=2 * B * HW * EE, transcendentals=0,
            bytes_accessed=B * HW * in_b + B * EE * in_b + HW * EE * w_b)
        out2 = pl.pallas_call(
            functools.partial(_fused_kernel, compute_dtype=compute_dtype),
            grid=(grid_b,),
            out_shape=jax.ShapeDtypeStruct((B, EE), out_dtype),
            in_specs=[
                pl.BlockSpec((b_tile, HW), lambda i: (i, 0)),      # streamed batch tiles
                _weight_spec((HW, EE), single_buffer_weight),      # resident fused weight
            ],
            out_specs=pl.BlockSpec((b_tile, EE), lambda i: (i, 0)),
            compiler_params=cparams,
            cost_estimate=cost,
        )(x2, wk)
        return out2.reshape(N, C, E, E)

    # separable two-matmul path
    wy = _padded_bilinear_matrix(size, pad_y, out_size=E, in_size=H)     # (E, H)
    wx = _padded_bilinear_matrix(size, pad_x, out_size=E, in_size=W)     # (E, W)
    wxt = wx.T.astype(compute_dtype)                                     # (W, E)
    wyt = wy.T.astype(compute_dtype)                                     # (H, E)
    x3 = img_nchw.reshape(B, H, W)
    cost = pl.CostEstimate(
        flops=2 * B * H * W * E + 2 * B * E * H * E, transcendentals=0,
        bytes_accessed=B * H * W * in_b + B * EE * in_b + (W * E + H * E) * w_b)
    out3 = pl.pallas_call(
        functools.partial(_separable_kernel, compute_dtype=compute_dtype),
        grid=(grid_b,),
        out_shape=jax.ShapeDtypeStruct((B, E, E), out_dtype),
        in_specs=[
            pl.BlockSpec((b_tile, H, W), lambda i: (i, 0, 0)),
            _weight_spec((W, E), single_buffer_weight),
            _weight_spec((H, E), single_buffer_weight),
        ],
        out_specs=pl.BlockSpec((b_tile, E, E), lambda i: (i, 0, 0)),
        compiler_params=cparams,
        cost_estimate=cost,
    )(x3, wxt, wyt)
    return out3.reshape(N, C, E, E)


# jit'ed so repeated calls with new random (size, pad) values hit the cache: the draws
# are dynamic scalars, never shapes -> trace/compile exactly once per geometry.
_resize_pad_jit = jax.jit(
    _resize_pad_impl,
    static_argnames=("end_size", "b_tile", "mode", "single_buffer_weight",
                     "compute_dtype_name", "vmem_limit_bytes"))

_SINGLE_BUFFER_WEIGHT_OK = True   # flipped off if this runtime rejects pl.Buffered(1)


def resize_pad_pallas(img_nchw, *, size, pad_y, pad_x, end_size,
                      compute_dtype=jnp.bfloat16, b_tile=None, mode="auto",
                      vmem_limit_bytes=None):
    global _SINGLE_BUFFER_WEIGHT_OK
    N, C, H, W = img_nchw.shape
    B, HW, EE = N * C, H * W, end_size * end_size
    in_b = jnp.dtype(img_nchw.dtype).itemsize
    w_b = jnp.dtype(compute_dtype).itemsize

    # VMEM-capacity-aware budgets (v5e/v6e: 128 MiB, v7x: 64 MiB per TensorCore).
    vmem_cap = _vmem_capacity_bytes()
    if vmem_limit_bytes is None:
        vmem_limit_bytes = int(vmem_cap * 3 // 4)
    budget = int(vmem_cap * 2 // 5)                  # weights + double-buffered tiles

    fused_w_bytes = HW * EE * w_b
    if mode == "auto":
        # Fused kron weight is O(H*W*E*E): switch to the separable path before it
        # dominates VMEM / FLOPs (roughly above 32x32 images).
        mode = "fused" if fused_w_bytes <= min(2 << 20, budget // 3) else "separable"
    if mode == "fused" and fused_w_bytes > budget:
        raise ValueError(
            f"fused resize+pad weight ({fused_w_bytes / 2**20:.1f} MiB) does not fit the "
            f"VMEM budget ({budget / 2**20:.1f} MiB); use mode='separable'")

    if b_tile is None:
        if mode == "fused":
            w_bytes = fused_w_bytes                                    # resident weight
            per_img = 2 * HW * in_b + 2 * EE * in_b + 4 * EE
        else:
            w_bytes = (W + H) * end_size * w_b
            per_img = 2 * H * W * in_b + 2 * EE * in_b + 4 * (H * end_size + 2 * EE)
        b_tile = max(8, (budget - w_bytes) // per_img)
    b_tile = int(min(b_tile, 4096, _round_up(B, 8)))
    if B >= 16:
        # >= 2 grid steps so v7x's two TensorCores can split the "parallel" batch axis;
        # on v5e/v6e the one extra grid step costs ~0.35 us (negligible).
        b_tile = min(b_tile, _round_up(pl.cdiv(B, 2), 8))
    if b_tile >= 256:
        b_tile = (b_tile // 256) * 256               # full MXU row granularity
    else:
        b_tile = max(8, (b_tile // 8) * 8)           # multiple of 8 sublanes

    kwargs = dict(end_size=end_size, b_tile=b_tile, mode=mode,
                  compute_dtype_name=jnp.dtype(compute_dtype).name,
                  vmem_limit_bytes=int(vmem_limit_bytes))
    use_sb = _SINGLE_BUFFER_WEIGHT_OK and hasattr(pl, "Buffered")
    try:
        return _resize_pad_jit(img_nchw, size, pad_y, pad_x,
                               single_buffer_weight=use_sb, **kwargs)
    except Exception:
        if not use_sb:
            raise
        _SINGLE_BUFFER_WEIGHT_OK = False             # runtime lacks Buffered(1) support
        return _resize_pad_jit(img_nchw, size, pad_y, pad_x,
                               single_buffer_weight=False, **kwargs)


# ------------------------------------------------------------------------------ module
class RandomResizePadPallas:
    """Mirror of the PyTorch RandomResizePad module (NCHW tensors).  Randomness is drawn
    with python `random` on the host; it only changes weight values, so the Pallas kernel
    is compiled once per image geometry, not per draw."""

    def __init__(self, l_size, h_size, end_size, interpolation=2, antialias='warn',
                 compute_dtype=jnp.bfloat16, mode="auto"):
        self.l_size = l_size
        self.h_size = h_size
        self.end_size = end_size
        self.interpolation = interpolation   # 2 == BILINEAR (only mode implemented)
        self.antialias = antialias           # tensor path behaves as antialias=False
        self.compute_dtype = compute_dtype
        self.mode = mode
        self.last_params = None

    def __call__(self, img_nchw):
        size = random.randint(self.l_size, self.h_size - 1)
        pad_x = random.randint(0, self.end_size - size)
        pad_y = random.randint(0, self.end_size - size)
        self.last_params = (size, pad_y, pad_x)
        return resize_pad_pallas(img_nchw, size=size, pad_y=pad_y, pad_x=pad_x,
                                 end_size=self.end_size,
                                 compute_dtype=self.compute_dtype, mode=self.mode)


# --------------------------------------------------------------------------- reference
def _bilinear_matrix_f32(out_size, in_size):
    scale = in_size / out_size
    dst = jnp.arange(out_size, dtype=jnp.float32)
    src = jnp.clip((dst + 0.5) * scale - 0.5, 0.0, float(in_size - 1))
    lo = jnp.floor(src)
    frac = src - lo
    lo_i = lo.astype(jnp.int32)
    hi_i = jnp.minimum(lo_i + 1, in_size - 1)
    rows = jnp.arange(out_size)
    w = jnp.zeros((out_size, in_size), jnp.float32)
    w = w.at[rows, lo_i].add(1.0 - frac)
    w = w.at[rows, hi_i].add(frac)
    return w


def _reference_resize_pad(img, size, pad_y, pad_x, end_size):
    """Pure-JAX f32 reference: resize-as-matmul then explicit zero-pad placement."""
    N, C, H, W = img.shape
    wy = _bilinear_matrix_f32(size, H)
    wx = _bilinear_matrix_f32(size, W)
    x = img.astype(jnp.float32).reshape(N * C, H, W)
    res = jnp.einsum('yh,bhw,xw->byx', wy, x, wx)
    out = jnp.zeros((N * C, end_size, end_size), jnp.float32)
    out = out.at[:, pad_y:pad_y + size, pad_x:pad_x + size].set(res)
    return out.reshape(N, C, end_size, end_size)


if __name__ == "__main__":
    random.seed(0)  # deterministic size / pad draws

    N, C, H, W = 2, 4, 16, 16
    l_size, h_size, end_size = 8, 13, 16
    img = jax.random.uniform(jax.random.PRNGKey(0), (N, C, H, W), dtype=jnp.float32)

    mod = RandomResizePadPallas(l_size, h_size, end_size)       # bf16 MXU inputs (default)
    out = jax.block_until_ready(mod(img))
    size, pad_y, pad_x = mod.last_params

    ref = _reference_resize_pad(img, size, pad_y, pad_x, end_size)
    assert out.shape == (N, C, end_size, end_size)
    assert out.dtype == img.dtype
    assert jnp.allclose(out, ref, atol=3e-2, rtol=3e-2), "bf16 fused path mismatch"

    # f32 fused path: tight check against the reference + pad region exactly zero.
    out_f32 = jax.block_until_ready(
        resize_pad_pallas(img, size=size, pad_y=pad_y, pad_x=pad_x, end_size=end_size,
                          compute_dtype=jnp.float32, mode="fused"))
    assert jnp.allclose(out_f32, ref, atol=1e-5, rtol=1e-5), "f32 fused path mismatch"
    assert float(jnp.sum(jnp.abs(out_f32[:, :, :pad_y, :]))) <= 1e-5
    assert float(jnp.sum(jnp.abs(out_f32[:, :, pad_y + size:, :]))) <= 1e-5
    assert float(jnp.sum(jnp.abs(out_f32[:, :, :, :pad_x]))) <= 1e-5
    assert float(jnp.sum(jnp.abs(out_f32[:, :, :, pad_x + size:]))) <= 1e-5

    # Ragged multi-step grid: B = 7*4 = 28 is NOT a multiple of b_tile=8, exercising the
    # pad-free path (clipped reads + masked writeback on the last block) over 4 steps.
    img_big = jax.random.uniform(jax.random.PRNGKey(1), (7, 4, H, W), dtype=jnp.float32)
    ref_big = _reference_resize_pad(img_big, size, pad_y, pad_x, end_size)
    out_big = jax.block_until_ready(
        resize_pad_pallas(img_big, size=size, pad_y=pad_y, pad_x=pad_x, end_size=end_size,
                          compute_dtype=jnp.float32, b_tile=8, mode="fused"))
    assert jnp.allclose(out_big, ref_big, atol=1e-5, rtol=1e-5), "ragged gridded mismatch"

    # Separable two-matmul path (the default for larger images), verified here at the
    # small demo geometry against the same reference.
    out_sep = jax.block_until_ready(
        resize_pad_pallas(img_big, size=size, pad_y=pad_y, pad_x=pad_x, end_size=end_size,
                          compute_dtype=jnp.float32, mode="separable"))
    assert jnp.allclose(out_sep, ref_big, atol=1e-5, rtol=1e-5), "separable path mismatch"

    print("KERNEL_OK")
</pallas_src>

<mosaic_0001>
module attributes {stable_mosaic.version = 11 : i64} {
  func.func private @main(%arg0: i32) attributes {dimension_semantics = [#tpu.dimension_semantics<core_parallel>], iteration_bounds = array<i64: 2>, tpu.core_type = #tpu.core_type<sc_scalar_subcore>, window_params = []} {
    return
  }
}

module attributes {stable_mosaic.version = 11 : i64} {
  func.func private @main(%arg0: i32) attributes {dimension_semantics = [#tpu.dimension_semantics<core_parallel>], iteration_bounds = array<i64: 2>, tpu.core_type = #tpu.core_type<sc_scalar_subcore>, window_params = []} {
    return
  }
}

module attributes {stable_mosaic.version = 11 : i64} {
  func.func @_fused_kernel(%arg0: i32, %arg1: memref<8x256xf32, #tpu.memory_space<vmem>>, %arg2: memref<256x256xbf16, #tpu.memory_space<vmem>>, %arg3: memref<8x256xf32, #tpu.memory_space<vmem>>) attributes {dimension_semantics = [#tpu.dimension_semantics<parallel>], iteration_bounds = array<i64: 1>, scalar_prefetch = 0 : i64, scratch_operands = 0 : i64, tpu.core_type = #tpu.core_type<tc>, window_params = [{transform_indices = @transform_0, window_bounds = array<i64: 8, 256>}, {pipeline_mode = #tpu.pipeline_mode<synchronous>, transform_indices = @transform_1, window_bounds = array<i64: 256, 256>}, {transform_indices = @transform_2, window_bounds = array<i64: 8, 256>}]} {
    %c0 = arith.constant 0 : index
    %c0_0 = arith.constant 0 : index
    %0 = vector.load %arg1[%c0, %c0_0] : memref<8x256xf32, #tpu.memory_space<vmem>>, vector<8x256xf32>
    %1 = arith.truncf %0 : vector<8x256xf32> to vector<8x256xbf16>
    %c0_1 = arith.constant 0 : index
    %c0_2 = arith.constant 0 : index
    %2 = vector.load %arg2[%c0_1, %c0_2] : memref<256x256xbf16, #tpu.memory_space<vmem>>, vector<256x256xbf16>
    %cst = arith.constant dense<0.000000e+00> : vector<8x256xf32>
    %3 = tpu.matmul %1, %2, %cst {dimension_numbers = #tpu.dot_dimension_numbers<[1], [0], [0], [1], [0, 0, 1, 1], [], []>} : vector<8x256xbf16>, vector<256x256xbf16>, vector<8x256xf32> -> vector<8x256xf32>
    %c0_3 = arith.constant 0 : index
    %c0_4 = arith.constant 0 : index
    %4 = vector.load %arg3[%c0_3, %c0_4] : memref<8x256xf32, #tpu.memory_space<vmem>>, vector<8x256xf32>
    tpu.vector_store %arg3[%c0_3, %c0_4], %3 {strides = array<i32>} : memref<8x256xf32, #tpu.memory_space<vmem>>, vector<8x256xf32>,
    return
  }
  func.func @transform_0(%arg0: i32) -> (i32, i32) {
    %c0_i32 = arith.constant 0 : i32
    %c0_i32_0 = arith.constant 0 : i32
    return %arg0, %c0_i32 : i32, i32
  }
  func.func @transform_1(%arg0: i32) -> (i32, i32) {
    %c0_i32 = arith.constant 0 : i32
    %c0_i32_0 = arith.constant 0 : i32
    %c0_i32_1 = arith.constant 0 : i32
    return %c0_i32, %c0_i32_0 : i32, i32
  }
  func.func @transform_2(%arg0: i32) -> (i32, i32) {
    %c0_i32 = arith.constant 0 : i32
    %c0_i32_0 = arith.constant 0 : i32
    return %arg0, %c0_i32 : i32, i32
  }
}

module attributes {stable_mosaic.version = 11 : i64} {
  func.func private @main(%arg0: i32) attributes {dimension_semantics = [#tpu.dimension_semantics<core_parallel>], iteration_bounds = array<i64: 2>, tpu.core_type = #tpu.core_type<sc_scalar_subcore>, window_params = []} {
    return
  }
}

module attributes {stable_mosaic.version = 11 : i64} {
  func.func private @main(%arg0: i32) attributes {dimension_semantics = [#tpu.dimension_semantics<core_parallel>], iteration_bounds = array<i64: 2>, tpu.core_type = #tpu.core_type<sc_scalar_subcore>, window_params = []} {
    return
  }
}

module attributes {stable_mosaic.version = 11 : i64} {
  func.func @_fused_kernel(%arg0: i32, %arg1: memref<8x256xf32, #tpu.memory_space<vmem>>, %arg2: memref<256x256xbf16, #tpu.memory_space<vmem>>, %arg3: memref<8x256xf32, #tpu.memory_space<vmem>>) attributes {dimension_semantics = [#tpu.dimension_semantics<parallel>], iteration_bounds = array<i64: 1>, scalar_prefetch = 0 : i64, scratch_operands = 0 : i64, tpu.core_type = #tpu.core_type<tc>, window_params = [{transform_indices = @transform_0, window_bounds = array<i64: 8, 256>}, {pipeline_mode = #tpu.pipeline_mode<synchronous>, transform_indices = @transform_1, window_bounds = array<i64: 256, 256>}, {transform_indices = @transform_2, window_bounds = array<i64: 8, 256>}]} {
    %c0 = arith.constant 0 : index
    %c0_0 = arith.constant 0 : index
    %0 = vector.load %arg1[%c0, %c0_0] : memref<8x256xf32, #tpu.memory_space<vmem>>, vector<8x256xf32>
    %1 = arith.truncf %0 : vector<8x256xf32> to vector<8x256xbf16>
    %c0_1 = arith.constant 0 : index
    %c0_2 = arith.constant 0 : index
    %2 = vector.load %arg2[%c0_1, %c0_2] : memref<256x256xbf16, #tpu.memory_space<vmem>>, vector<256x256xbf16>
    %cst = arith.constant dense<0.000000e+00> : vector<8x256xf32>
    %3 = tpu.matmul %1, %2, %cst {dimension_numbers = #tpu.dot_dimension_numbers<[1], [0], [0], [1], [0, 0, 1, 1], [], []>} : vector<8x256xbf16>, vector<256x256xbf16>, vector<8x256xf32> -> vector<8x256xf32>
    %c0_3 = arith.constant 0 : index
    %c0_4 = arith.constant 0 : index
    %4 = vector.load %arg3[%c0_3, %c0_4] : memref<8x256xf32, #tpu.memory_space<vmem>>, vector<8x256xf32>
    tpu.vector_store %arg3[%c0_3, %c0_4], %3 {strides = array<i32>} : memref<8x256xf32, #tpu.memory_space<vmem>>, vector<8x256xf32>,
    return
  }
  func.func @transform_0(%arg0: i32) -> (i32, i32) {
    %c0_i32 = arith.constant 0 : i32
    %c0_i32_0 = arith.constant 0 : i32
    return %arg0, %c0_i32 : i32, i32
  }
  func.func @transform_1(%arg0: i32) -> (i32, i32) {
    %c0_i32 = arith.constant 0 : i32
    %c0_i32_0 = arith.constant 0 : i32
    %c0_i32_1 = arith.constant 0 : i32
    return %c0_i32, %c0_i32_0 : i32, i32
  }
  func.func @transform_2(%arg0: i32) -> (i32, i32) {
    %c0_i32 = arith.constant 0 : i32
    %c0_i32_0 = arith.constant 0 : i32
    return %arg0, %c0_i32 : i32, i32
  }
}

</mosaic_0001>

<llo_original>
// kernel: _resize_pad_impl.1
$region0: #{_resize_pad_impl.1}
  #allocation0 [shape = 'u32[]', space=smem, size = 0x4, offset = 0x4, fixed_abs, tag = 'smem constant byte address 0x4 - core index']
  #allocation1 [shape = 'u32[144,128]{1,0:T(1,128)}', space=vmem, size = 0x12000, scoped, tag = 'internal scratch']
  %s0 = inlined_call_operand.vmem [shape: f32[8,256], index: 0, kind: input, shape index: {}]
  %s1 = inlined_call_operand.vmem [shape: bf16[256,256], index: 1, kind: input, shape index: {}]
  %s2 = inlined_call_operand.vmem [shape: f32[8,256], index: 2, kind: output, shape index: {}]
  %s3 = sld [smem:[#allocation0]]
  $region18: #{_resize_pad_impl.1} parent=0
    _
  %s5 = ssub.s32 1, %s3
  %s6 = scalar_select 0, %s5, %s3
  // Predicated region
  $region2: #{_resize_pad_impl.1} parent=0 // pred_check
    _
  $region3: #{_resize_pad_impl.1} parent=0 // pred_check_branch
    %8 = sbr.rel (0) target = $region5
  $region4: #{_resize_pad_impl.1} parent=0 // pred_region
    _
  $region5: #{_resize_pad_impl.1} parent=0 // pred_fallthru
    _
  // Predicated region
  $region6: #{_resize_pad_impl.1} parent=0 // pred_check
    _
  $region7: #{_resize_pad_impl.1} parent=0 // pred_check_branch
    %10 = sbr.rel (0) target = $region9
  $region8: #{_resize_pad_impl.1} parent=0 // pred_region
    _
  $region9: #{_resize_pad_impl.1} parent=0 // pred_fallthru
    _
  %v11 = vld [vmem:[%s0] sm:$0xff]
  %v12 = vld [vmem:[%s0 + $0x8] sm:$0xff]
  %v13 = vpack.c.bf16 %v11, %v11
  %v14 = vpack.c.bf16 %v12, %v12
  %v15 = vld [vmem:[%s1] sm:$0xff]
  %v16 = vld [vmem:[%s1 + $0x8] sm:$0xff]
  %v17 = vld [vmem:[%s1 + $0x10] sm:$0xff]
  %v18 = vld [vmem:[%s1 + $0x18] sm:$0xff]
  %v19 = vld [vmem:[%s1 + $0x20] sm:$0xff]
  %v20 = vld [vmem:[%s1 + $0x28] sm:$0xff]
  %v21 = vld [vmem:[%s1 + $0x30] sm:$0xff]
  %v22 = vld [vmem:[%s1 + $0x38] sm:$0xff]
  %v23 = vld [vmem:[%s1 + $0x40] sm:$0xff]
  %v24 = vld [vmem:[%s1 + $0x48] sm:$0xff]
  %v25 = vld [vmem:[%s1 + $0x50] sm:$0xff]
  %v26 = vld [vmem:[%s1 + $0x58] sm:$0xff]
  %v27 = vld [vmem:[%s1 + $0x60] sm:$0xff]
  %v28 = vld [vmem:[%s1 + $0x68] sm:$0xff]
  %v29 = vld [vmem:[%s1 + $0x70] sm:$0xff]
  %v30 = vld [vmem:[%s1 + $0x78] sm:$0xff]
  %v31 = vld [vmem:[%s1 + $0x80] sm:$0xff]
  %v32 = vld [vmem:[%s1 + $0x88] sm:$0xff]
  %v33 = vld [vmem:[%s1 + $0x90] sm:$0xff]
  %v34 = vld [vmem:[%s1 + $0x98] sm:$0xff]
  %v35 = vld [vmem:[%s1 + $0xa0] sm:$0xff]
  %v36 = vld [vmem:[%s1 + $0xa8] sm:$0xff]
  %v37 = vld [vmem:[%s1 + $0xb0] sm:$0xff]
  %v38 = vld [vmem:[%s1 + $0xb8] sm:$0xff]
  %v39 = vld [vmem:[%s1 + $0xc0] sm:$0xff]
  %v40 = vld [vmem:[%s1 + $0xc8] sm:$0xff]
  %v41 = vld [vmem:[%s1 + $0xd0] sm:$0xff]
  %v42 = vld [vmem:[%s1 + $0xd8] sm:$0xff]
  %v43 = vld [vmem:[%s1 + $0xe0] sm:$0xff]
  %v44 = vld [vmem:[%s1 + $0xe8] sm:$0xff]
  %v45 = vld [vmem:[%s1 + $0xf0] sm:$0xff]
  %v46 = vld [vmem:[%s1 + $0xf8] sm:$0xff]
  %v79 = vunpack.c.l.b16 %v15
  %v80 = vunpack.c.h.b16 %v15
  %v81 = vunpack.c.l.b16 %v16
  %v82 = vunpack.c.h.b16 %v16
  %v83 = vunpack.c.l.b16 %v17
  %v84 = vunpack.c.h.b16 %v17
  %v85 = vunpack.c.l.b16 %v18
  %v86 = vunpack.c.h.b16 %v18
  %v87 = vunpack.c.l.b16 %v19
  %v88 = vunpack.c.h.b16 %v19
  %v89 = vunpack.c.l.b16 %v20
  %v90 = vunpack.c.h.b16 %v20
  %v91 = vunpack.c.l.b16 %v21
  %v92 = vunpack.c.h.b16 %v21
  %v93 = vunpack.c.l.b16 %v22
  %v94 = vunpack.c.h.b16 %v22
  %v95 = vunpack.c.l.b16 %v23
  %v96 = vunpack.c.h.b16 %v23
  %v97 = vunpack.c.l.b16 %v24
  %v98 = vunpack.c.h.b16 %v24
  %v99 = vunpack.c.l.b16 %v25
  %v100 = vunpack.c.h.b16 %v25
  %v101 = vunpack.c.l.b16 %v26
  %v102 = vunpack.c.h.b16 %v26
  %v103 = vunpack.c.l.b16 %v27
  %v104 = vunpack.c.h.b16 %v27
  %v105 = vunpack.c.l.b16 %v28
  %v106 = vunpack.c.h.b16 %v28
  %v107 = vunpack.c.l.b16 %v29
  %v108 = vunpack.c.h.b16 %v29
  %v109 = vunpack.c.l.b16 %v30
  %v110 = vunpack.c.h.b16 %v30
  %v111 = vunpack.c.l.b16 %v31
  %v112 = vunpack.c.h.b16 %v31
  %v113 = vunpack.c.l.b16 %v32
  %v114 = vunpack.c.h.b16 %v32
  %v115 = vunpack.c.l.b16 %v33
  %v116 = vunpack.c.h.b16 %v33
  %v117 = vunpack.c.l.b16 %v34
  %v118 = vunpack.c.h.b16 %v34
  %v119 = vunpack.c.l.b16 %v35
  %v120 = vunpack.c.h.b16 %v35
  %v121 = vunpack.c.l.b16 %v36
  %v122 = vunpack.c.h.b16 %v36
  %v123 = vunpack.c.l.b16 %v37
  %v124 = vunpack.c.h.b16 %v37
  %v125 = vunpack.c.l.b16 %v38
  %v126 = vunpack.c.h.b16 %v38
  %v127 = vunpack.c.l.b16 %v39
  %v128 = vunpack.c.h.b16 %v39
  %v129 = vunpack.c.l.b16 %v40
  %v130 = vunpack.c.h.b16 %v40
  %v131 = vunpack.c.l.b16 %v41
  %v132 = vunpack.c.h.b16 %v41
  %v133 = vunpack.c.l.b16 %v42
  %v134 = vunpack.c.h.b16 %v42
  %v135 = vunpack.c.l.b16 %v43
  %v136 = vunpack.c.h.b16 %v43
  %v137 = vunpack.c.l.b16 %v44
  %v138 = vunpack.c.h.b16 %v44
  %v139 = vunpack.c.l.b16 %v45
  %v140 = vunpack.c.h.b16 %v45
  %v141 = vunpack.c.l.b16 %v46
  %v142 = vunpack.c.h.b16 %v46
  %v143 = vpack.c.b16 %v81, %v79
  %v144 = vpack.c.b16 %v82, %v80
  %v145 = vpack.c.b16 %v85, %v83
  %v146 = vpack.c.b16 %v86, %v84
  %v147 = vpack.c.b16 %v89, %v87
  %v148 = vpack.c.b16 %v90, %v88
  %v149 = vpack.c.b16 %v93, %v91
  %v150 = vpack.c.b16 %v94, %v92
  %v151 = vpack.c.b16 %v97, %v95
  %v152 = vpack.c.b16 %v98, %v96
  %v153 = vpack.c.b16 %v101, %v99
  %v154 = vpack.c.b16 %v102, %v100
  %v155 = vpack.c.b16 %v105, %v103
  %v156 = vpack.c.b16 %v106, %v104
  %v157 = vpack.c.b16 %v109, %v107
  %v158 = vpack.c.b16 %v110, %v108
  %v159 = vpack.c.b16 %v113, %v111
  %v160 = vpack.c.b16 %v114, %v112
  %v161 = vpack.c.b16 %v117, %v115
  %v162 = vpack.c.b16 %v118, %v116
  %v163 = vpack.c.b16 %v121, %v119
  %v164 = vpack.c.b16 %v122, %v120
  %v165 = vpack.c.b16 %v125, %v123
  %v166 = vpack.c.b16 %v126, %v124
  %v167 = vpack.c.b16 %v129, %v127
  %v168 = vpack.c.b16 %v130, %v128
  %v169 = vpack.c.b16 %v133, %v131
  %v170 = vpack.c.b16 %v134, %v132
  %v171 = vpack.c.b16 %v137, %v135
  %v172 = vpack.c.b16 %v138, %v136
  %v173 = vpack.c.b16 %v141, %v139
  %v174 = vpack.c.b16 %v142, %v140
  %207 = vmatprep.subr.bf16.mxu0 %v144
  %208 = vmatpush1.bf16.msra.mxu0 %v143
  %209 = vmatprep.subr.bf16.mxu0 %v146
  %210 = vmatpush1.bf16.msra.mxu0 %v145
  %211 = vmatprep.subr.bf16.mxu0 %v148
  %212 = vmatpush1.bf16.msra.mxu0 %v147
  %213 = vmatprep.subr.bf16.mxu0 %v150
  %214 = vmatpush1.bf16.msra.mxu0 %v149
  %215 = vmatprep.subr.bf16.mxu0 %v152
  %216 = vmatpush1.bf16.msra.mxu0 %v151
  %217 = vmatprep.subr.bf16.mxu0 %v154
  %218 = vmatpush1.bf16.msra.mxu0 %v153
  %219 = vmatprep.subr.bf16.mxu0 %v156
  %220 = vmatpush1.bf16.msra.mxu0 %v155
  %221 = vmatprep.subr.bf16.mxu0 %v158
  %222 = vmatpush1.bf16.msra.mxu0 %v157
  %223 = vmatprep.subr.bf16.mxu0 %v160
  %224 = vmatpush1.bf16.msra.mxu0 %v159
  %225 = vmatprep.subr.bf16.mxu0 %v162
  %226 = vmatpush1.bf16.msra.mxu0 %v161
  %227 = vmatprep.subr.bf16.mxu0 %v164
  %228 = vmatpush1.bf16.msra.mxu0 %v163
  %229 = vmatprep.subr.bf16.mxu0 %v166
  %230 = vmatpush1.bf16.msra.mxu0 %v165
  %231 = vmatprep.subr.bf16.mxu0 %v168
  %232 = vmatpush1.bf16.msra.mxu0 %v167
  %233 = vmatprep.subr.bf16.mxu0 %v170
  %234 = vmatpush1.bf16.msra.mxu0 %v169
  %235 = vmatprep.subr.bf16.mxu0 %v172
  %236 = vmatpush1.bf16.msra.mxu0 %v171
  %237 = vmatprep.subr.bf16.mxu0 %v174
  %238 = vmatpush1.bf16.msra.mxu0 %v173
  %239 = vmatprep.mubr.bf16.mxu0 %v14
  %240 = vmatmul.mubr.bf16.gmra.mrb[0].mxu0 %v13
  %v241 = vpop.f32.mrb[0].mxu0
  %v242 = vadd.f32 0.0, %v241
  %v243 = vpop.f32.mrb[0].mxu0
  %v244 = vadd.f32 0.0, %v243
  %v245 = vpop.f32.mrb[0].mxu0
  %v246 = vpop.f32.mrb[0].mxu0
  %247 = vdwg.mxu0
  %248 = vst [vmem:[%s2] sm:$0xff] %v242
  %249 = vst [vmem:[%s2 + $0x8] sm:$0xff] %v244
  // Predicated region
  $region10: #{_resize_pad_impl.1} parent=0 // pred_check
    _
  $region11: #{_resize_pad_impl.1} parent=0 // pred_check_branch
    %251 = sbr.rel (0) target = $region13
  $region12: #{_resize_pad_impl.1} parent=0 // pred_region
    _
  $region13: #{_resize_pad_impl.1} parent=0 // pred_fallthru
    _
  // Predicated region
  $region14: #{_resize_pad_impl.1} parent=0 // pred_check
    _
  $region15: #{_resize_pad_impl.1} parent=0 // pred_check_branch
    %253 = sbr.rel (0) target = $region17
  $region16: #{_resize_pad_impl.1} parent=0 // pred_region
    _
  $region17: #{_resize_pad_impl.1} parent=0 // pred_fallthru
    _

// kernel: _resize_pad_impl.1
$region0: #{_resize_pad_impl.1}
  #allocation0 [shape = 'u32[]', space=smem, size = 0x4, offset = 0x4, fixed_abs, tag = 'smem constant byte address 0x4 - core index']
  #allocation1 [shape = 'u32[144,128]{1,0:T(1,128)}', space=vmem, size = 0x12000, scoped, tag = 'internal scratch']
  %s0 = inlined_call_operand.vmem [shape: f32[8,256], index: 0, kind: input, shape index: {}]
  %s1 = inlined_call_operand.vmem [shape: bf16[256,256], index: 1, kind: input, shape index: {}]
  %s2 = inlined_call_operand.vmem [shape: f32[8,256], index: 2, kind: output, shape index: {}]
  %s3 = sld [smem:[#allocation0]]
  $region18: #{_resize_pad_impl.1} parent=0
    _
  %s5 = ssub.s32 1, %s3
  %s6 = scalar_select 0, %s5, %s3
  // Predicated region
  $region2: #{_resize_pad_impl.1} parent=0 // pred_check
    _
  $region3: #{_resize_pad_impl.1} parent=0 // pred_check_branch
    %8 = sbr.rel (0) target = $region5
  $region4: #{_resize_pad_impl.1} parent=0 // pred_region
    _
  $region5: #{_resize_pad_impl.1} parent=0 // pred_fallthru
    _
  // Predicated region
  $region6: #{_resize_pad_impl.1} parent=0 // pred_check
    _
  $region7: #{_resize_pad_impl.1} parent=0 // pred_check_branch
    %10 = sbr.rel (0) target = $region9
  $region8: #{_resize_pad_impl.1} parent=0 // pred_region
    _
  $region9: #{_resize_pad_impl.1} parent=0 // pred_fallthru
    _
  %v11 = vld [vmem:[%s0] sm:$0xff]
  %v12 = vld [vmem:[%s0 + $0x8] sm:$0xff]
  %v13 = vpack.c.bf16 %v11, %v11
  %v14 = vpack.c.bf16 %v12, %v12
  %v15 = vld [vmem:[%s1] sm:$0xff]
  %v16 = vld [vmem:[%s1 + $0x8] sm:$0xff]
  %v17 = vld [vmem:[%s1 + $0x10] sm:$0xff]
  %v18 = vld [vmem:[%s1 + $0x18] sm:$0xff]
  %v19 = vld [vmem:[%s1 + $0x20] sm:$0xff]
  %v20 = vld [vmem:[%s1 + $0x28] sm:$0xff]
  %v21 = vld [vmem:[%s1 + $0x30] sm:$0xff]
  %v22 = vld [vmem:[%s1 + $0x38] sm:$0xff]
  %v23 = vld [vmem:[%s1 + $0x40] sm:$0xff]
  %v24 = vld [vmem:[%s1 + $0x48] sm:$0xff]
  %v25 = vld [vmem:[%s1 + $0x50] sm:$0xff]
  %v26 = vld [vmem:[%s1 + $0x58] sm:$0xff]
  %v27 = vld [vmem:[%s1 + $0x60] sm:$0xff]
  %v28 = vld [vmem:[%s1 + $0x68] sm:$0xff]
  %v29 = vld [vmem:[%s1 + $0x70] sm:$0xff]
  %v30 = vld [vmem:[%s1 + $0x78] sm:$0xff]
  %v31 = vld [vmem:[%s1 + $0x80] sm:$0xff]
  %v32 = vld [vmem:[%s1 + $0x88] sm:$0xff]
  %v33 = vld [vmem:[%s1 + $0x90] sm:$0xff]
  %v34 = vld [vmem:[%s1 + $0x98] sm:$0xff]
  %v35 = vld [vmem:[%s1 + $0xa0] sm:$0xff]
  %v36 = vld [vmem:[%s1 + $0xa8] sm:$0xff]
  %v37 = vld [vmem:[%s1 + $0xb0] sm:$0xff]
  %v38 = vld [vmem:[%s1 + $0xb8] sm:$0xff]
  %v39 = vld [vmem:[%s1 + $0xc0] sm:$0xff]
  %v40 = vld [vmem:[%s1 + $0xc8] sm:$0xff]
  %v41 = vld [vmem:[%s1 + $0xd0] sm:$0xff]
  %v42 = vld [vmem:[%s1 + $0xd8] sm:$0xff]
  %v43 = vld [vmem:[%s1 + $0xe0] sm:$0xff]
  %v44 = vld [vmem:[%s1 + $0xe8] sm:$0xff]
  %v45 = vld [vmem:[%s1 + $0xf0] sm:$0xff]
  %v46 = vld [vmem:[%s1 + $0xf8] sm:$0xff]
  %v79 = vunpack.c.l.b16 %v15
  %v80 = vunpack.c.h.b16 %v15
  %v81 = vunpack.c.l.b16 %v16
  %v82 = vunpack.c.h.b16 %v16
  %v83 = vunpack.c.l.b16 %v17
  %v84 = vunpack.c.h.b16 %v17
  %v85 = vunpack.c.l.b16 %v18
  %v86 = vunpack.c.h.b16 %v18
  %v87 = vunpack.c.l.b16 %v19
  %v88 = vunpack.c.h.b16 %v19
  %v89 = vunpack.c.l.b16 %v20
  %v90 = vunpack.c.h.b16 %v20
  %v91 = vunpack.c.l.b16 %v21
  %v92 = vunpack.c.h.b16 %v21
  %v93 = vunpack.c.l.b16 %v22
  %v94 = vunpack.c.h.b16 %v22
  %v95 = vunpack.c.l.b16 %v23
  %v96 = vunpack.c.h.b16 %v23
  %v97 = vunpack.c.l.b16 %v24
  %v98 = vunpack.c.h.b16 %v24
  %v99 = vunpack.c.l.b16 %v25
  %v100 = vunpack.c.h.b16 %v25
  %v101 = vunpack.c.l.b16 %v26
  %v102 = vunpack.c.h.b16 %v26
  %v103 = vunpack.c.l.b16 %v27
  %v104 = vunpack.c.h.b16 %v27
  %v105 = vunpack.c.l.b16 %v28
  %v106 = vunpack.c.h.b16 %v28
  %v107 = vunpack.c.l.b16 %v29
  %v108 = vunpack.c.h.b16 %v29
  %v109 = vunpack.c.l.b16 %v30
  %v110 = vunpack.c.h.b16 %v30
  %v111 = vunpack.c.l.b16 %v31
  %v112 = vunpack.c.h.b16 %v31
  %v113 = vunpack.c.l.b16 %v32
  %v114 = vunpack.c.h.b16 %v32
  %v115 = vunpack.c.l.b16 %v33
  %v116 = vunpack.c.h.b16 %v33
  %v117 = vunpack.c.l.b16 %v34
  %v118 = vunpack.c.h.b16 %v34
  %v119 = vunpack.c.l.b16 %v35
  %v120 = vunpack.c.h.b16 %v35
  %v121 = vunpack.c.l.b16 %v36
  %v122 = vunpack.c.h.b16 %v36
  %v123 = vunpack.c.l.b16 %v37
  %v124 = vunpack.c.h.b16 %v37
  %v125 = vunpack.c.l.b16 %v38
  %v126 = vunpack.c.h.b16 %v38
  %v127 = vunpack.c.l.b16 %v39
  %v128 = vunpack.c.h.b16 %v39
  %v129 = vunpack.c.l.b16 %v40
  %v130 = vunpack.c.h.b16 %v40
  %v131 = vunpack.c.l.b16 %v41
  %v132 = vunpack.c.h.b16 %v41
  %v133 = vunpack.c.l.b16 %v42
  %v134 = vunpack.c.h.b16 %v42
  %v135 = vunpack.c.l.b16 %v43
  %v136 = vunpack.c.h.b16 %v43
  %v137 = vunpack.c.l.b16 %v44
  %v138 = vunpack.c.h.b16 %v44
  %v139 = vunpack.c.l.b16 %v45
  %v140 = vunpack.c.h.b16 %v45
  %v141 = vunpack.c.l.b16 %v46
  %v142 = vunpack.c.h.b16 %v46
  %v143 = vpack.c.b16 %v81, %v79
  %v144 = vpack.c.b16 %v82, %v80
  %v145 = vpack.c.b16 %v85, %v83
  %v146 = vpack.c.b16 %v86, %v84
  %v147 = vpack.c.b16 %v89, %v87
  %v148 = vpack.c.b16 %v90, %v88
  %v149 = vpack.c.b16 %v93, %v91
  %v150 = vpack.c.b16 %v94, %v92
  %v151 = vpack.c.b16 %v97, %v95
  %v152 = vpack.c.b16 %v98, %v96
  %v153 = vpack.c.b16 %v101, %v99
  %v154 = vpack.c.b16 %v102, %v100
  %v155 = vpack.c.b16 %v105, %v103
  %v156 = vpack.c.b16 %v106, %v104
  %v157 = vpack.c.b16 %v109, %v107
  %v158 = vpack.c.b16 %v110, %v108
  %v159 = vpack.c.b16 %v113, %v111
  %v160 = vpack.c.b16 %v114, %v112
  %v161 = vpack.c.b16 %v117, %v115
  %v162 = vpack.c.b16 %v118, %v116
  %v163 = vpack.c.b16 %v121, %v119
  %v164 = vpack.c.b16 %v122, %v120
  %v165 = vpack.c.b16 %v125, %v123
  %v166 = vpack.c.b16 %v126, %v124
  %v167 = vpack.c.b16 %v129, %v127
  %v168 = vpack.c.b16 %v130, %v128
  %v169 = vpack.c.b16 %v133, %v131
  %v170 = vpack.c.b16 %v134, %v132
  %v171 = vpack.c.b16 %v137, %v135
  %v172 = vpack.c.b16 %v138, %v136
  %v173 = vpack.c.b16 %v141, %v139
  %v174 = vpack.c.b16 %v142, %v140
  %207 = vmatprep.subr.bf16.mxu0 %v144
  %208 = vmatpush1.bf16.msra.mxu0 %v143
  %209 = vmatprep.subr.bf16.mxu0 %v146
  %210 = vmatpush1.bf16.msra.mxu0 %v145
  %211 = vmatprep.subr.bf16.mxu0 %v148
  %212 = vmatpush1.bf16.msra.mxu0 %v147
  %213 = vmatprep.subr.bf16.mxu0 %v150
  %214 = vmatpush1.bf16.msra.mxu0 %v149
  %215 = vmatprep.subr.bf16.mxu0 %v152
  %216 = vmatpush1.bf16.msra.mxu0 %v151
  %217 = vmatprep.subr.bf16.mxu0 %v154
  %218 = vmatpush1.bf16.msra.mxu0 %v153
  %219 = vmatprep.subr.bf16.mxu0 %v156
  %220 = vmatpush1.bf16.msra.mxu0 %v155
  %221 = vmatprep.subr.bf16.mxu0 %v158
  %222 = vmatpush1.bf16.msra.mxu0 %v157
  %223 = vmatprep.subr.bf16.mxu0 %v160
  %224 = vmatpush1.bf16.msra.mxu0 %v159
  %225 = vmatprep.subr.bf16.mxu0 %v162
  %226 = vmatpush1.bf16.msra.mxu0 %v161
  %227 = vmatprep.subr.bf16.mxu0 %v164
  %228 = vmatpush1.bf16.msra.mxu0 %v163
  %229 = vmatprep.subr.bf16.mxu0 %v166
  %230 = vmatpush1.bf16.msra.mxu0 %v165
  %231 = vmatprep.subr.bf16.mxu0 %v168
  %232 = vmatpush1.bf16.msra.mxu0 %v167
  %233 = vmatprep.subr.bf16.mxu0 %v170
  %234 = vmatpush1.bf16.msra.mxu0 %v169
  %235 = vmatprep.subr.bf16.mxu0 %v172
  %236 = vmatpush1.bf16.msra.mxu0 %v171
  %237 = vmatprep.subr.bf16.mxu0 %v174
  %238 = vmatpush1.bf16.msra.mxu0 %v173
  %239 = vmatprep.mubr.bf16.mxu0 %v14
  %240 = vmatmul.mubr.bf16.gmra.mrb[0].mxu0 %v13
  %v241 = vpop.f32.mrb[0].mxu0
  %v242 = vadd.f32 0.0, %v241
  %v243 = vpop.f32.mrb[0].mxu0
  %v244 = vadd.f32 0.0, %v243
  %v245 = vpop.f32.mrb[0].mxu0
  %v246 = vpop.f32.mrb[0].mxu0
  %247 = vdwg.mxu0
  %248 = vst [vmem:[%s2] sm:$0xff] %v242
  %249 = vst [vmem:[%s2 + $0x8] sm:$0xff] %v244
  // Predicated region
  $region10: #{_resize_pad_impl.1} parent=0 // pred_check
    _
  $region11: #{_resize_pad_impl.1} parent=0 // pred_check_branch
    %251 = sbr.rel (0) target = $region13
  $region12: #{_resize_pad_impl.1} parent=0 // pred_region
    _
  $region13: #{_resize_pad_impl.1} parent=0 // pred_fallthru
    _
  // Predicated region
  $region14: #{_resize_pad_impl.1} parent=0 // pred_check
    _
  $region15: #{_resize_pad_impl.1} parent=0 // pred_check_branch
    %253 = sbr.rel (0) target = $region17
  $region16: #{_resize_pad_impl.1} parent=0 // pred_region
    _
  $region17: #{_resize_pad_impl.1} parent=0 // pred_fallthru
    _

</llo_original>
